<compile_context>
chip_gen: v7x
topology: tpu7x:2x2x1
jax: 0.10.0
libtpu: 0.0.40
codegen_flags: <defaults>
</compile_context>

<pallas_src>
import jax
import jax.numpy as jnp
from jax.experimental import pallas as pl
from jax.experimental.pallas import tpu as pltpu

_LANE = 128
_SUBLANE = 8
_MAX_TILE_ROWS = 2048  # 2048 * 128 * 4 B = 1 MiB per output block


def _round_up(n: int, m: int) -> int:
    return ((n + m - 1) // m) * m


def _scalar_fill_kernel(w_ref, out_ref):
    # w_ref : SMEM (1, 1) raw parameter w
    # out_ref: VMEM (TILE_R, 128) sublane+lane dense output block
    splat = jnp.full(out_ref.shape, w_ref[0, 0], dtype=jnp.float32)
    out_ref[...] = jax.nn.sigmoid(splat)  # EUP work co-issues with stores


@jax.jit
def scalar_forward(x, w):
    """Equivalent of scalar.forward(x): sigmoid(w * ones(B, 1))."""
    B = x.shape[0]

    # Sublane+lane dense padded slab: rows of 128 lanes, rows multiple of 8.
    rows = max(1, pl.cdiv(B, _LANE))
    tile_r = min(_MAX_TILE_ROWS, _round_up(rows, _SUBLANE))
    rp = _round_up(rows, tile_r)
    grid = (rp // tile_r,)

    w2d = jnp.asarray(w, dtype=jnp.float32).reshape(1, 1)

    out_slab = pl.pallas_call(
        _scalar_fill_kernel,
        out_shape=jax.ShapeDtypeStruct((rp, _LANE), jnp.float32),
        grid=grid,
        in_specs=[pl.BlockSpec(memory_space=pltpu.SMEM)],
        out_specs=pl.BlockSpec((tile_r, _LANE), lambda i: (i, 0)),
        compiler_params=pltpu.CompilerParams(
            dimension_semantics=("parallel",)),  # 2 TCs on v7x
    )(w2d)

    # Layout plumbing back to the module's (B, 1) contract; fused under jit.
    return out_slab.reshape(-1)[:B].reshape(B, 1)


if __name__ == "__main__":
    key = jax.random.PRNGKey(0)
    # Small NCHW input consistent with the module's usage (only batch dim used).
    x = jax.random.normal(key, (2, 4, 16, 16), dtype=jnp.float32)

    # Deterministic parameter init: w = 1.0 * init_weights, init_weights = 1.0
    init_weights = 1.0
    w = jnp.float32(1.0) * init_weights

    out = scalar_forward(x, w)
    out = jax.block_until_ready(out)

    # Reference check.
    ref = jax.nn.sigmoid(w * jnp.ones((x.shape[0], 1), dtype=jnp.float32))
    assert out.shape == (x.shape[0], 1)
    assert jnp.allclose(out, ref, atol=1e-6), (out, ref)

    print("KERNEL_OK")
</pallas_src>

<mosaic_0001>
module attributes {stable_mosaic.version = 11 : i64} {
  func.func @_scalar_fill_kernel(%arg0: i32, %arg1: memref<1x1xf32, #tpu.memory_space<smem>>, %arg2: memref<8x128xf32, #tpu.memory_space<vmem>>) attributes {dimension_semantics = [#tpu.dimension_semantics<parallel>], iteration_bounds = array<i64: 1>, scalar_prefetch = 0 : i64, scratch_operands = 0 : i64, tpu.core_type = #tpu.core_type<tc>, window_params = [{transform_indices = @transform_0, window_bounds = array<i64: 1, 1>}, {transform_indices = @transform_1, window_bounds = array<i64: 8, 128>}]} {
    %c0 = arith.constant 0 : index
    %c0_0 = arith.constant 0 : index
    %0 = memref.load %arg1[%c0, %c0_0] : memref<1x1xf32, #tpu.memory_space<smem>>
    %1 = vector.broadcast %0 : f32 to vector<8x128xf32>
    %2 = arith.negf %1 : vector<8x128xf32>
    %3 = math.exp %2 : vector<8x128xf32>
    %cst = arith.constant 1.000000e+00 : f32
    %4 = vector.broadcast %cst : f32 to vector<8x128xf32>
    %5 = arith.addf %4, %3 : vector<8x128xf32>
    %6 = arith.divf %4, %5 : vector<8x128xf32>
    %c0_1 = arith.constant 0 : index
    %c0_2 = arith.constant 0 : index
    %7 = vector.load %arg2[%c0_1, %c0_2] : memref<8x128xf32, #tpu.memory_space<vmem>>, vector<8x128xf32>
    tpu.vector_store %arg2[%c0_1, %c0_2], %6 {strides = array<i32>} : memref<8x128xf32, #tpu.memory_space<vmem>>, vector<8x128xf32>,
    return
  }
  func.func @transform_0(%arg0: i32) -> (i32, i32) {
    %c0_i32 = arith.constant 0 : i32
    %c0_i32_0 = arith.constant 0 : i32
    %c0_i32_1 = arith.constant 0 : i32
    return %c0_i32, %c0_i32_0 : i32, i32
  }
  func.func @transform_1(%arg0: i32) -> (i32, i32) {
    %c0_i32 = arith.constant 0 : i32
    %c0_i32_0 = arith.constant 0 : i32
    return %arg0, %c0_i32 : i32, i32
  }
}

</mosaic_0001>

<llo_original>
// kernel: scalar_forward.1
$region0: #{scalar_forward.1}
  #allocation0 [shape = 'u32[]', space=smem, size = 0x4, offset = 0x4, fixed_abs, tag = 'smem constant byte address 0x4 - core index']
  #allocation1 [shape = 'u32[144,128]{1,0:T(1,128)}', space=vmem, size = 0x12000, scoped, tag = 'internal scratch']
  #allocation2 [shape = 'f32[1,1]{1,0:T(1,128)S(6)}', space=smem, size = 0x200, scoped, tag = 'scoped memory for scalar_forward.1']
  %s0 = inlined_call_operand.<no memory space> [shape: f32[1,1], index: 0, kind: input, shape index: {}]
  %s1 = inlined_call_operand.vmem [shape: f32[8,128], index: 1, kind: output, shape index: {}]
  %s2 = sld [smem:[#allocation0]]
  $region14: #{scalar_forward.1} parent=0
    _
  %s4 = ssub.s32 1, %s2
  %s5 = scalar_select 0, %s4, %s2
  %6 = sst [smem:[#allocation2]] %s0
  // Predicated region
  $region2: #{scalar_forward.1} parent=0 // pred_check
    _
  $region3: #{scalar_forward.1} parent=0 // pred_check_branch
    %8 = sbr.rel (0) target = $region5
  $region4: #{scalar_forward.1} parent=0 // pred_region
    _
  $region5: #{scalar_forward.1} parent=0 // pred_fallthru
    _
  %s9 = sld [smem:[#allocation2]]
  %v10 = vstv %s9
  %v11 = vxor.u32 %v10, 2147483648
  %v12 = vmul.f32 %v11, 1.442695
  %v13 = vpow.pop %v12
  %v14 = vadd.f32 %v13, 1.0
  %v15 = vrcp.pop %v14
  %v16 = vmul.f32 1.0, %v15
  %17 = vst [vmem:[%s1] sm:$0xff] %v16
  // Predicated region
  $region6: #{scalar_forward.1} parent=0 // pred_check
    _
  $region7: #{scalar_forward.1} parent=0 // pred_check_branch
    %19 = sbr.rel (0) target = $region9
  $region8: #{scalar_forward.1} parent=0 // pred_region
    _
  $region9: #{scalar_forward.1} parent=0 // pred_fallthru
    _
  // Predicated region
  $region10: #{scalar_forward.1} parent=0 // pred_check
    _
  $region11: #{scalar_forward.1} parent=0 // pred_check_branch
    %21 = sbr.rel (0) target = $region13
  $region12: #{scalar_forward.1} parent=0 // pred_region
    _
  $region13: #{scalar_forward.1} parent=0 // pred_fallthru
    _

</llo_original>
